<compile_context>
chip_gen: v7x
topology: tpu7x:2x2x1
jax: 0.10.0
libtpu: 0.0.40
codegen_flags: <defaults>
</compile_context>

<pallas_src>
import jax
import jax.numpy as jnp
from jax.experimental import pallas as pl
from jax.experimental.pallas import tpu as pltpu


def _round_up(a, b):
    return (a + b - 1) // b * b


def _make_kernel(tb, L, W):
    """TV-loss body for a (tb, L) lane-dense block with a resident column mask."""
    w1 = (W == 1)
    groups = tb // 8

    def kernel(mask_ref, x_ref, out_ref):
        i = pl.program_id(1)

        @pl.when(i == 0)
        def _init():
            out_ref[...] = jnp.zeros_like(out_ref)

        y = x_ref[...].astype(jnp.float32)                 # (tb, L)

        if w1:
            # h_tv = x[h+1] - x[h]  (L == H here); |.|
            dh = pltpu.roll(y, L - 1, axis=1) - y
            val = jnp.abs(dh)
        else:
            # c = h*W + w ; neighbour below is c+W, neighbour right is c+1.
            dh = pltpu.roll(y, L - W, axis=1) - y          # x[h+1, w] - x[h, w]
            dw = pltpu.roll(y, L - 1, axis=1) - y          # x[h, w+1] - x[h, w]
            val = jnp.sqrt(dw * dw + dh * dh + 1e-5)

        # Fold planes in sublane groups of 8 (layout-preserving reshape, pure
        # VPU adds), then apply the column mask once on the folded tile.
        partial = val.reshape(groups, 8, L).sum(axis=0)    # (8, L)
        out_ref[...] = out_ref[...] + (partial * mask_ref[...])[None]

    return kernel


def tv_loss(x, block_planes=None):
    """Pallas implementation of TVLoss.forward for NCHW input."""
    N, C, H, W = x.shape
    P = N * C
    L = H * W
    xf = x.reshape(P, L)                       # lane-dense layout, pure reshape

    if block_planes is None:
        # ~4 MiB f32 input block: amortizes the per-step overhead; double-
        # buffered (~8 MiB) it fits v5e's 16 MiB default scoped VMEM, and the
        # larger generations sit comfortably on the HBM roofline with it.
        target_bytes = 4 * 1024 * 1024
        tb = max(8, (target_bytes // (L * 4)) // 8 * 8)
    else:
        tb = max(8, _round_up(block_planes, 8))
    tb = min(tb, _round_up(P, 8))

    blocks = (P + tb - 1) // tb
    num_cores = 2 if blocks >= 2 else 1        # leading "parallel" axis (v7x: 2 TCs)
    inner = (blocks + num_cores - 1) // num_cores
    P_pad = num_cores * inner * tb
    if P_pad != P:
        xf = jnp.pad(xf, ((0, P_pad - P), (0, 0)))   # zero planes; corrected below

    # Column-validity mask, built once host-side; resident in VMEM via a
    # constant index_map (never re-fetched, never recomputed in-kernel).
    col = jnp.arange(L, dtype=jnp.int32)
    if W == 1:
        valid = col < (H - 1)
    else:
        valid = ((col % W) < (W - 1)) & (col < (H - 1) * W)
    mask = jnp.broadcast_to(valid.astype(jnp.float32), (8, L))

    partials = pl.pallas_call(
        _make_kernel(tb, L, W),
        out_shape=jax.ShapeDtypeStruct((num_cores, 8, L), jnp.float32),
        grid_spec=pltpu.PrefetchScalarGridSpec(
            num_scalar_prefetch=0,
            grid=(num_cores, inner),
            in_specs=[
                pl.BlockSpec((8, L), lambda c, i: (0, 0)),                # mask
                pl.BlockSpec((tb, L), lambda c, i: (c * inner + i, 0)),   # planes
            ],
            # Same output block across the inner reduction axis -> resident
            # lane-dense per-core accumulator, written back once per core.
            out_specs=pl.BlockSpec((1, 8, L), lambda c, i: (c, 0, 0)),
        ),
        compiler_params=pltpu.CompilerParams(
            dimension_semantics=("parallel", "arbitrary")),
    )(mask, xf)

    total = jnp.sum(partials)

    if W == 1:
        # Padded (all-zero) planes contribute exactly 0 on this branch.
        count = P * (H - 1)
    else:
        count = P * (H - 1) * (W - 1)
        pad_planes = P_pad - P
        if pad_planes:
            # Each padded plane contributes exactly (H-1)*(W-1)*sqrt(1e-5).
            total = total - jnp.float32(pad_planes * (H - 1) * (W - 1)) * jnp.sqrt(
                jnp.float32(1e-5))

    # NOTE: H == 1 gives count == 0 -> NaN, matching the reference empty mean.
    return (total / count).astype(x.dtype)


def _tv_loss_ref(x):
    # Pure-JAX reference mirroring the PyTorch module exactly.
    if x.shape[-1] == 1:
        h_tv = x[:, :, 1:, :] - x[:, :, :-1, :]
        return jnp.mean(jnp.abs(h_tv))
    h_tv = x[:, :, 1:, :-1] - x[:, :, :-1, :-1]
    w_tv = x[:, :, :-1, 1:] - x[:, :, :-1, :-1]
    return jnp.mean(jnp.sqrt(w_tv ** 2 + h_tv ** 2 + 1e-5))


if __name__ == "__main__":
    key = jax.random.PRNGKey(0)
    k1, k2, k3, k4 = jax.random.split(key, 4)

    # Main branch: W > 1 (single block, single core)
    x = jax.random.normal(k1, (2, 4, 16, 16), dtype=jnp.float32)
    out = jax.block_until_ready(tv_loss(x))
    ref = _tv_loss_ref(x)
    assert jnp.allclose(out, ref, rtol=1e-5, atol=1e-6), (out, ref)

    # Degenerate branch: W == 1
    x1 = jax.random.normal(k2, (2, 4, 16, 1), dtype=jnp.float32)
    out1 = jax.block_until_ready(tv_loss(x1))
    ref1 = _tv_loss_ref(x1)
    assert jnp.allclose(out1, ref1, rtol=1e-5, atol=1e-6), (out1, ref1)

    # Multi-block path with plane padding + analytic correction
    # (P=20, tb=8 -> blocks=3 -> 2 cores x 2 inner, 12 padded planes)
    x2 = jax.random.normal(k3, (4, 5, 16, 16), dtype=jnp.float32)
    out2 = jax.block_until_ready(tv_loss(x2, block_planes=8))
    ref2 = _tv_loss_ref(x2)
    assert jnp.allclose(out2, ref2, rtol=1e-5, atol=1e-6), (out2, ref2)

    # Two-core split with no padding (P=32, tb=16 -> 2 cores x 1 inner)
    x3 = jax.random.normal(k4, (4, 8, 16, 16), dtype=jnp.float32)
    out3 = jax.block_until_ready(tv_loss(x3, block_planes=16))
    ref3 = _tv_loss_ref(x3)
    assert jnp.allclose(out3, ref3, rtol=1e-5, atol=1e-6), (out3, ref3)

    print("KERNEL_OK")
</pallas_src>

<mosaic_0001>
module attributes {stable_mosaic.version = 11 : i64} {
  func.func @kernel(%arg0: i32, %arg1: i32, %arg2: memref<8x256xf32, #tpu.memory_space<vmem>>, %arg3: memref<8x256xf32, #tpu.memory_space<vmem>>, %arg4: memref<1x8x256xf32, #tpu.memory_space<vmem>>) attributes {dimension_semantics = [#tpu.dimension_semantics<parallel>, #tpu.dimension_semantics<arbitrary>], iteration_bounds = array<i64: 1, 1>, scalar_prefetch = 0 : i64, scratch_operands = 0 : i64, tpu.core_type = #tpu.core_type<tc>, window_params = [{pipeline_mode = #tpu.pipeline_mode<synchronous>, transform_indices = @transform_0, window_bounds = array<i64: 8, 256>}, {transform_indices = @transform_1, window_bounds = array<i64: 8, 256>}, {transform_indices = @transform_2, window_bounds = array<i64: 1, 8, 256>}]} {
    %c0_i32 = arith.constant 0 : i32
    %0 = arith.cmpi eq, %arg1, %c0_i32 : i32
    %1 = arith.extui %0 : i1 to i32
    %c0_i32_0 = arith.constant 0 : i32
    %2 = arith.cmpi ne, %1, %c0_i32_0 : i32
    scf.if %2 {
      %cst_11 = arith.constant 0.000000e+00 : f32
      %22 = vector.broadcast %cst_11 : f32 to vector<1x8x256xf32>
      %c0_12 = arith.constant 0 : index
      %c0_13 = arith.constant 0 : index
      %c0_14 = arith.constant 0 : index
      %23 = vector.load %arg4[%c0_12, %c0_13, %c0_14] : memref<1x8x256xf32, #tpu.memory_space<vmem>>, vector<1x8x256xf32>
      tpu.vector_store %arg4[%c0_12, %c0_13, %c0_14], %22 {strides = array<i32>} : memref<1x8x256xf32, #tpu.memory_space<vmem>>, vector<1x8x256xf32>,
    } else {
    }
    %c0 = arith.constant 0 : index
    %c0_1 = arith.constant 0 : index
    %3 = vector.load %arg3[%c0, %c0_1] : memref<8x256xf32, #tpu.memory_space<vmem>>, vector<8x256xf32>
    %c240_i32 = arith.constant 240 : i32
    %4 = tpu.dynamic_rotate %3 by %c240_i32 dim 1 : vector<8x256xf32>, i32 -> vector<8x256xf32>
    %5 = arith.subf %4, %3 : vector<8x256xf32>
    %c255_i32 = arith.constant 255 : i32
    %6 = tpu.dynamic_rotate %3 by %c255_i32 dim 1 : vector<8x256xf32>, i32 -> vector<8x256xf32>
    %7 = arith.subf %6, %3 : vector<8x256xf32>
    %8 = arith.mulf %7, %7 : vector<8x256xf32>
    %9 = arith.mulf %5, %5 : vector<8x256xf32>
    %10 = arith.addf %8, %9 : vector<8x256xf32>
    %cst = arith.constant 9.99999974E-6 : f32
    %11 = vector.broadcast %cst : f32 to vector<8x256xf32>
    %12 = arith.addf %10, %11 : vector<8x256xf32>
    %13 = math.sqrt %12 : vector<8x256xf32>
    %14 = vector.shape_cast %13 : vector<8x256xf32> to vector<1x8x256xf32>
    %cst_2 = arith.constant dense<0.000000e+00> : vector<8x256xf32>
    %15 = vector.multi_reduction <add>, %14, %cst_2 [0] : vector<1x8x256xf32> to vector<8x256xf32>
    %c0_3 = arith.constant 0 : index
    %c0_4 = arith.constant 0 : index
    %c0_5 = arith.constant 0 : index
    %16 = vector.load %arg4[%c0_3, %c0_4, %c0_5] : memref<1x8x256xf32, #tpu.memory_space<vmem>>, vector<1x8x256xf32>
    %c0_6 = arith.constant 0 : index
    %c0_7 = arith.constant 0 : index
    %17 = vector.load %arg2[%c0_6, %c0_7] : memref<8x256xf32, #tpu.memory_space<vmem>>, vector<8x256xf32>
    %18 = arith.mulf %15, %17 : vector<8x256xf32>
    %19 = vector.shape_cast %18 : vector<8x256xf32> to vector<1x8x256xf32>
    %20 = arith.addf %16, %19 : vector<1x8x256xf32>
    %c0_8 = arith.constant 0 : index
    %c0_9 = arith.constant 0 : index
    %c0_10 = arith.constant 0 : index
    %21 = vector.load %arg4[%c0_8, %c0_9, %c0_10] : memref<1x8x256xf32, #tpu.memory_space<vmem>>, vector<1x8x256xf32>
    tpu.vector_store %arg4[%c0_8, %c0_9, %c0_10], %20 {strides = array<i32>} : memref<1x8x256xf32, #tpu.memory_space<vmem>>, vector<1x8x256xf32>,
    return
  }
  func.func @transform_0(%arg0: i32, %arg1: i32) -> (i32, i32) {
    %c0_i32 = arith.constant 0 : i32
    %c0_i32_0 = arith.constant 0 : i32
    %c0_i32_1 = arith.constant 0 : i32
    return %c0_i32, %c0_i32_0 : i32, i32
  }
  func.func @transform_1(%arg0: i32, %arg1: i32) -> (i32, i32) {
    %c1_i32 = arith.constant 1 : i32
    %0 = arith.muli %arg0, %c1_i32 : i32
    %1 = arith.addi %0, %arg1 : i32
    %c0_i32 = arith.constant 0 : i32
    %c0_i32_0 = arith.constant 0 : i32
    return %1, %c0_i32 : i32, i32
  }
  func.func @transform_2(%arg0: i32, %arg1: i32) -> (i32, i32, i32) {
    %c0_i32 = arith.constant 0 : i32
    %c0_i32_0 = arith.constant 0 : i32
    %c0_i32_1 = arith.constant 0 : i32
    return %arg0, %c0_i32, %c0_i32_0 : i32, i32, i32
  }
}

</mosaic_0001>

<llo_original>
// kernel: tpu_custom_call.1
$region0: #{tpu_custom_call.1}
  #allocation0 [shape = 'u32[]', space=smem, size = 0x4, offset = 0x4, fixed_abs, tag = 'smem constant byte address 0x4 - core index']
  #allocation1 [shape = 'u32[144,128]{1,0:T(1,128)}', space=vmem, size = 0x12000, scoped, tag = 'internal scratch']
  %s0 = inlined_call_operand.hbm [shape: f32[8,256], index: 0, kind: input, shape index: {}]
  %s1 = inlined_call_operand.hbm [shape: f32[8,256], index: 1, kind: input, shape index: {}]
  %s2 = inlined_call_operand.hbm [shape: f32[1,8,256], index: 2, kind: output, shape index: {}]
  %s3 = sld [smem:[#allocation0]]
  $region30: #{tpu_custom_call.1} parent=0
    _
  %s5 = ssub.s32 1, %s3
  %s6 = scalar_select 0, %s5, %s3
  $region1: #{tpu_custom_call.1} parent=0
    #allocation2 [shape = 'u8[8192]{0}', space=vmem, size = 0x2000, scoped, tag = 'input window, operand 0, single buffered']
    #allocation3 [shape = 's32[1]{0}', space=sflag, size = 0x4, scoped, tag = 'scoped memory for tpu_custom_call.1']
    #allocation4 [shape = 's32[1]{0}', space=sflag, size = 0x4, scoped, tag = 'scoped memory for tpu_custom_call.1']
    #allocation5 [shape = 'u8[8192]{0}', space=vmem, size = 0x2000, scoped, tag = 'input window, operand 1, single buffered']
    #allocation6 [shape = 's32[1]{0}', space=sflag, size = 0x4, scoped, tag = 'scoped memory for tpu_custom_call.1']
    #allocation7 [shape = 'u8[8192]{0}', space=vmem, size = 0x2000, scoped, tag = 'output window, operand 0, single buffered']
    %7 = vsyncpa [#allocation3], 0
    %8 = vsyncpa [#allocation6], 0
    %9 = vsyncpa [#allocation4], 0
    // Predicated region
    $region2: #{tpu_custom_call.1} parent=1 // pred_check
      _
    $region3: #{tpu_custom_call.1} parent=1 // pred_check_branch
      %11 = sbr.rel (0) target = $region5
    $region4: #{tpu_custom_call.1} parent=1 // pred_region
      %s13 = ssub.s32 256, 256
      %14 = vsyncadd [#allocation3], %s13
      %s16 = sshll.u32 [#allocation2], 4
      %s17 = int_to_ptr.vmem [resolvable:$true] %s16
      %19 = dma.hbm_to_vmem [thread:$0]  %s0, 256, %s17, [#allocation3]
    $region5: #{tpu_custom_call.1} parent=1 // pred_fallthru
      _
    // Predicated region
    $region6: #{tpu_custom_call.1} parent=1 // pred_check
      _
    $region7: #{tpu_custom_call.1} parent=1 // pred_check_branch
      %21 = sbr.rel (0) target = $region9
    $region8: #{tpu_custom_call.1} parent=1 // pred_region
      %s22 = sadd.s32 0, 0
      %s24 = ssub.s32 256, 256
      %25 = vsyncadd [#allocation6], %s24
      %s26 = smul.addr %s22, 2
      %s27 = smul.addr %s26, 128
      %s28 = scalar_lea.hbm %s1, %s27
      %s30 = sshll.u32 [#allocation5], 4
      %s31 = int_to_ptr.vmem [resolvable:$true] %s30
      %33 = dma.hbm_to_vmem [thread:$0]  %s28, 256, %s31, [#allocation6]
    $region9: #{tpu_custom_call.1} parent=1 // pred_fallthru
      _
    // Predicated region
    $region10: #{tpu_custom_call.1} parent=1 // pred_check
      _
    $region11: #{tpu_custom_call.1} parent=1 // pred_check_branch
      %35 = sbr.rel (0) target = $region13
    $region12: #{tpu_custom_call.1} parent=1 // pred_region
      %36 = dma.done [#allocation3], 256
    $region13: #{tpu_custom_call.1} parent=1 // pred_fallthru
      _
    // Predicated region
    $region14: #{tpu_custom_call.1} parent=1 // pred_check
      _
    $region15: #{tpu_custom_call.1} parent=1 // pred_check_branch
      %38 = sbr.rel (0) target = $region17
    $region16: #{tpu_custom_call.1} parent=1 // pred_region
      %39 = dma.done [#allocation6], 256
    $region17: #{tpu_custom_call.1} parent=1 // pred_fallthru
      _
    %s40 = sadd.s32 0, 0
    %p41 = scmp.eq.s32.totalorder 0, 0
    // Predicated region
    $region18: #{tpu_custom_call.1} parent=1 // pred_check
      %p42 = pneg %p41
    $region19: #{tpu_custom_call.1} parent=1 // pred_check_branch
      %44 = sbr.rel (%p42) target = $region21
    $region20: #{tpu_custom_call.1} parent=1 // pred_region
      %45 = vst [vmem:[#allocation7] sm:$0xff] 0.0
      %46 = vst [vmem:[#allocation7 + $0x8] sm:$0xff] 0.0
    $region21: #{tpu_custom_call.1} parent=1 // pred_fallthru
      _
    %v47 = vld [vmem:[#allocation5] sm:$0xff]
    %v48 = vld [vmem:[#allocation5 + $0x8] sm:$0xff]
    %49 = vrot.lane.b32.xlu0 %v47, 112
    %v50 = vpop.permute.xlu0 %49
    %51 = vrot.lane.b32.xlu0 %v48, 112
    %v52 = vpop.permute.xlu0 %51
    %v53 = vlaneseq
    %v54 = vand.u32 %v53, 127
    %vm55 = vcmp.lt.s32.totalorder %v54, 112
    %v56 = vsel %vm55, %v50, %v52
    %v57 = vsel %vm55, %v52, %v50
    %v58 = vsub.f32 %v56, %v47
    %v59 = vsub.f32 %v57, %v48
    %60 = vrot.lane.b32.xlu0 %v47, 127
    %v61 = vpop.permute.xlu0 %60
    %62 = vrot.lane.b32.xlu0 %v48, 127
    %v63 = vpop.permute.xlu0 %62
    %vm64 = vcmp.lt.s32.totalorder %v54, 127
    %v65 = vsel %vm64, %v61, %v63
    %v66 = vsel %vm64, %v63, %v61
    %v67 = vsub.f32 %v65, %v47
    %v68 = vsub.f32 %v66, %v48
    %v69 = vmul.f32 %v67, %v67
    %v70 = vmul.f32 %v68, %v68
    %v71 = vmul.f32 %v58, %v58
    %v72 = vmul.f32 %v59, %v59
    %v73 = vadd.f32 %v69, %v71
    %v74 = vadd.f32 %v70, %v72
    %v75 = vadd.f32 %v73, 1e-05
    %v76 = vadd.f32 %v74, 1e-05
    %v77 = vrsqrt.pop %v75
    %v78 = vmul.f32 %v75, %v77
    %vm79 = vcmp.eq.f32.partialorder %v75, inf
    %v80 = vsel %vm79, %v75, %v78
    %vm81 = vcmp.eq.f32.partialorder %v75, 0.0
    %v82 = vand.u32 %v75, 2147483648
    %v83 = vsel %vm81, %v82, %v80
    %v84 = vrsqrt.pop %v76
    %v85 = vmul.f32 %v76, %v84
    %vm86 = vcmp.eq.f32.partialorder %v76, inf
    %v87 = vsel %vm86, %v76, %v85
    %vm88 = vcmp.eq.f32.partialorder %v76, 0.0
    %v89 = vand.u32 %v76, 2147483648
    %v90 = vsel %vm88, %v89, %v87
    %v91 = vadd.f32 %v83, 0.0
    %v92 = vadd.f32 %v90, 0.0
    %v93 = vld [vmem:[#allocation7] sm:$0xff]
    %v94 = vld [vmem:[#allocation7 + $0x8] sm:$0xff]
    %v95 = vld [vmem:[#allocation2] sm:$0xff]
    %v96 = vld [vmem:[#allocation2 + $0x8] sm:$0xff]
    %v97 = vmul.f32 %v91, %v95
    %v98 = vmul.f32 %v92, %v96
    %v99 = vadd.f32 %v93, %v97
    %v100 = vadd.f32 %v94, %v98
    %101 = vst [vmem:[#allocation7] sm:$0xff] %v99
    %102 = vst [vmem:[#allocation7 + $0x8] sm:$0xff] %v100
    // Predicated region
    $region22: #{tpu_custom_call.1} parent=1 // pred_check
      _
    $region23: #{tpu_custom_call.1} parent=1 // pred_check_branch
      %104 = sbr.rel (0) target = $region25
    $region24: #{tpu_custom_call.1} parent=1 // pred_region
      %s106 = ssub.s32 256, 256
      %107 = vsyncadd [#allocation4], %s106
      %s109 = sshll.u32 [#allocation7], 4
      %s110 = int_to_ptr.vmem [resolvable:$true] %s109
      %112 = dma.vmem_to_hbm [thread:$0]  %s110, 256, %s2, [#allocation4]
    $region25: #{tpu_custom_call.1} parent=1 // pred_fallthru
      _
    // Predicated region
    $region26: #{tpu_custom_call.1} parent=1 // pred_check
      _
    $region27: #{tpu_custom_call.1} parent=1 // pred_check_branch
      %114 = sbr.rel (0) target = $region29
    $region28: #{tpu_custom_call.1} parent=1 // pred_region
      %115 = dma.done [#allocation4], 256
    $region29: #{tpu_custom_call.1} parent=1 // pred_fallthru
      _
    %116 = vsyncpa [#allocation3], 1
    %117 = vsyncpa [#allocation6], 1
    %118 = vsyncpa [#allocation4], 1

</llo_original>
